<compile_context>
chip_gen: v7x
topology: tpu7x:2x2x1
jax: 0.10.0
libtpu: 0.0.40
codegen_flags: <defaults>
</compile_context>

<pallas_src>
import math

import numpy as np

import jax
import jax.numpy as jnp
from jax.experimental import pallas as pl
from jax.experimental.pallas import tpu as pltpu

STATE = 8       # fc1 input dim (hard-coded in the PyTorch module)
H1 = 512        # width of each fc1 branch
H1P = 2 * H1    # fused fc1_l|fc1_r width
H2 = 256        # fc2 width
OUT_PAD = 128   # fc3 output padded to one full lane tile


# --------------------------------------------------------------------------
# Kernel
# --------------------------------------------------------------------------
def make_qnetwork_kernel(compute_dtype):
    """Build the QNetwork forward kernel for one batch tile.

    compute_dtype: dtype of the fc1/fc2 epilogue (bias add / ReLU / l+r add).
    bf16 on v6e/v7x (bf16 VALU), f32 on v5e. MXU accumulation is f32 always.

    w1 = [w1_l | w1_r] : (8, 1024) bf16     b1 = [b1_l | b1_r] : (1, 1024) f32
    w2 : (512, 256) bf16                    b2 : (1, 256) f32
    w3 : (256, 128) bf16 (cols >= action_size zero)   b3 : (1, 128) f32
    """
    def kernel(x_ref, w1_ref, b1_ref, w2_ref, b2_ref, w3_ref, b3_ref, out_ref):
        zero = jnp.zeros((), compute_dtype)
        x = x_ref[...].astype(jnp.bfloat16)                              # (TB, 8)

        # Fused fc1_l | fc1_r: one MXU push instead of two. f32 accumulate,
        # then a single cast into the epilogue dtype.
        y1 = jnp.dot(x, w1_ref[...], preferred_element_type=jnp.float32)
        y1 = y1.astype(compute_dtype) + b1_ref[...].astype(compute_dtype)  # (TB, 1024)
        # relu(fc1_l(x)) + relu(fc1_r(x)); 512 is lane-aligned -> free slices.
        h = jnp.maximum(y1[:, :H1], zero) + jnp.maximum(y1[:, H1:], zero)  # (TB, 512)

        # fc2 + ReLU
        h2 = jnp.dot(h.astype(jnp.bfloat16), w2_ref[...],
                     preferred_element_type=jnp.float32)                   # (TB, 256)
        h2 = jnp.maximum(h2.astype(compute_dtype) + b2_ref[...].astype(compute_dtype),
                         zero)

        # fc3 (no activation); padded columns carry zero weights/bias.
        # f32 bias add, then a single cast to the (bf16) output dtype so the
        # padded writeback is half the bytes but still an unmasked vst.
        y3 = jnp.dot(h2.astype(jnp.bfloat16), w3_ref[...],
                     preferred_element_type=jnp.float32) + b3_ref[...]     # (TB, 128)
        out_ref[...] = y3.astype(out_ref.dtype)

    return kernel


# --------------------------------------------------------------------------
# Wrapper
# --------------------------------------------------------------------------
def pack_params(p):
    """Fuse fc1, downcast weights to bf16, lane-pad fc3 to 128 outputs."""
    w1 = jnp.concatenate([p["w1l"], p["w1r"]], axis=1).astype(jnp.bfloat16)  # (8, 1024)
    b1 = jnp.concatenate([p["b1l"], p["b1r"]], axis=1)                       # (1, 1024) f32
    w2 = p["w2"].astype(jnp.bfloat16)                                        # (512, 256)
    b2 = p["b2"]                                                             # (1, 256) f32
    action_size = p["w3"].shape[1]
    w3 = jnp.zeros((H2, OUT_PAD), jnp.bfloat16).at[:, :action_size].set(
        p["w3"].astype(jnp.bfloat16))                                        # (256, 128)
    b3 = jnp.zeros((1, OUT_PAD), jnp.float32).at[:, :action_size].set(p["b3"])
    return (w1, b1, w2, b2, w3, b3), action_size


def _default_compute_dtype():
    """bf16 epilogue on v6e/v7x (bf16 VALU); f32 on older generations."""
    try:
        kind = jax.devices()[0].device_kind.lower()
    except Exception:  # pragma: no cover - defensive
        kind = ""
    if any(tag in kind for tag in ("v2", "v3", "v4", "v5")):
        return jnp.float32
    return jnp.bfloat16


def _round_up(x, m):
    return ((x + m - 1) // m) * m


def qnetwork_forward(x, packed_params, action_size, *, batch_tile=2048,
                     compute_dtype=None, out_dtype=jnp.bfloat16):
    """Run the Pallas QNetwork kernel on a (B, 8) batch of states.

    The batch is tiled along a 1-D "parallel" grid. Weights/biases use a
    constant index_map so they are DMA'd once and stay VMEM-resident across
    grid steps. Returns a float32 (B, action_size) array.
    """
    if compute_dtype is None:
        compute_dtype = _default_compute_dtype()

    w1, b1, w2, b2, w3, b3 = packed_params
    B, state_dim = x.shape            # state_dim must be 8 (module hard-codes it)
    assert state_dim == STATE, f"fc1 input is hard-coded to {STATE}, got {state_dim}"
    batch_tile = max(8, _round_up(batch_tile, 8))

    # --- tile selection -----------------------------------------------------
    bp = _round_up(B, 8)                       # sublane-friendly padded batch
    n_steps = pl.cdiv(bp, batch_tile)          # steps needed at the requested tile
    if bp >= 256:
        n_steps = max(n_steps, 2)              # keep v7x's second TC busy
    tb = _round_up(pl.cdiv(bp, n_steps), 8)    # even split (no near-empty tail tile)
    bp = n_steps * tb
    if bp != B:
        x = jnp.pad(x, ((0, bp - B), (0, 0)))
    grid = (n_steps,)

    x_map = lambda i: (i, 0)          # batch-tiled
    const_map = lambda i: (0, 0)      # weights/biases: same block every step

    out_itemsize = np.dtype(out_dtype).itemsize
    cost = pl.CostEstimate(
        flops=2 * bp * (STATE * H1P + H1 * H2 + H2 * OUT_PAD),
        transcendentals=0,
        bytes_accessed=(x.size * x.dtype.itemsize
                        + bp * OUT_PAD * out_itemsize
                        + (w1.size + w2.size + w3.size) * 2
                        + (b1.size + b2.size + b3.size) * 4),
    )

    out = pl.pallas_call(
        make_qnetwork_kernel(compute_dtype),
        out_shape=jax.ShapeDtypeStruct((bp, OUT_PAD), out_dtype),
        grid=grid,
        in_specs=[
            pl.BlockSpec((tb, STATE), x_map),
            pl.BlockSpec(w1.shape, const_map),
            pl.BlockSpec(b1.shape, const_map),
            pl.BlockSpec(w2.shape, const_map),
            pl.BlockSpec(b2.shape, const_map),
            pl.BlockSpec(w3.shape, const_map),
            pl.BlockSpec(b3.shape, const_map),
        ],
        out_specs=pl.BlockSpec((tb, OUT_PAD), x_map),
        compiler_params=pltpu.CompilerParams(
            dimension_semantics=("parallel",),      # batch axis -> megacore on v7x
            vmem_limit_bytes=48 * 1024 * 1024,      # clear v5e's 16 MiB default,
        ),                                          # stay under v7x's 64 MiB physical
        cost_estimate=cost,
    )(x, w1, b1, w2, b2, w3, b3)

    # Padded rows / padded lanes are garbage by construction; slice them off
    # and return f32 like the PyTorch module.
    return out[:B, :action_size].astype(jnp.float32)


# --------------------------------------------------------------------------
# Init + references
# --------------------------------------------------------------------------
def _init_linear(key, in_features, out_features):
    """nn.Linear-style uniform(-1/sqrt(fan_in), 1/sqrt(fan_in)) init.

    Weight is (in_features, out_features) so each layer is y = x @ W + b.
    """
    kw, kb = jax.random.split(key)
    bound = 1.0 / math.sqrt(in_features)
    w = jax.random.uniform(kw, (in_features, out_features), jnp.float32,
                           minval=-bound, maxval=bound)
    b = jax.random.uniform(kb, (1, out_features), jnp.float32,
                           minval=-bound, maxval=bound)
    return w, b


def init_qnetwork_params(key, action_size=4):
    k1, k2, k3, k4 = jax.random.split(key, 4)
    w1l, b1l = _init_linear(k1, STATE, H1)
    w1r, b1r = _init_linear(k2, STATE, H1)
    w2, b2 = _init_linear(k3, H1, H2)
    w3, b3 = _init_linear(k4, H2, action_size)
    return dict(w1l=w1l, b1l=b1l, w1r=w1r, b1r=b1r, w2=w2, b2=b2, w3=w3, b3=b3)


def qnetwork_reference_f32(x, p):
    """Pure-f32 JAX reference of the module's forward pass."""
    o_l = jnp.maximum(x @ p["w1l"] + p["b1l"], 0.0)
    o_r = jnp.maximum(x @ p["w1r"] + p["b1r"], 0.0)
    o = jnp.maximum((o_l + o_r) @ p["w2"] + p["b2"], 0.0)
    return o @ p["w3"] + p["b3"]


def qnetwork_reference_quantized(x, p, compute_dtype, out_dtype=jnp.bfloat16):
    """Reference that mirrors the kernel's exact quantization path."""
    def dot(a, w):
        return jnp.dot(a.astype(jnp.bfloat16), w.astype(jnp.bfloat16),
                       preferred_element_type=jnp.float32)
    zero = jnp.zeros((), compute_dtype)
    w1 = jnp.concatenate([p["w1l"], p["w1r"]], axis=1)
    b1 = jnp.concatenate([p["b1l"], p["b1r"]], axis=1).astype(compute_dtype)
    y1 = dot(x, w1).astype(compute_dtype) + b1
    h = jnp.maximum(y1[:, :H1], zero) + jnp.maximum(y1[:, H1:], zero)
    h2 = jnp.maximum(dot(h, p["w2"]).astype(compute_dtype)
                     + p["b2"].astype(compute_dtype), zero)
    y3 = dot(h2, p["w3"]) + p["b3"]
    return y3.astype(out_dtype).astype(jnp.float32)


# --------------------------------------------------------------------------
# Self-test
# --------------------------------------------------------------------------
if __name__ == "__main__":
    key = jax.random.PRNGKey(0)
    k_params, k_x = jax.random.split(key)

    batch = 2
    action_size = 4

    params = init_qnetwork_params(k_params, action_size=action_size)
    packed, act = pack_params(params)
    x = jax.random.normal(k_x, (batch, STATE), jnp.float32)

    compute_dtype = _default_compute_dtype()
    out = qnetwork_forward(x, packed, act, compute_dtype=compute_dtype)
    out = jax.block_until_ready(out)
    assert out.shape == (batch, action_size)

    # Tight check: kernel vs a reference with identical quantization path.
    ref_q = qnetwork_reference_quantized(x, params, compute_dtype)
    assert jnp.allclose(out, ref_q, atol=1.5e-2, rtol=1.5e-2), \
        "mismatch vs quantized reference"

    # Loose check: semantic fidelity vs the pure-f32 module forward
    # (difference is the intentional bf16 weight/epilogue quantization only).
    ref_f32 = qnetwork_reference_f32(x, params)
    assert jnp.allclose(out, ref_f32, atol=6e-2, rtol=6e-2), \
        "mismatch vs f32 reference"

    print("KERNEL_OK")
</pallas_src>

<mosaic_0001>
module attributes {stable_mosaic.version = 11 : i64} {
  func.func @kernel(%arg0: i32, %arg1: memref<8x8xf32, #tpu.memory_space<vmem>>, %arg2: memref<8x1024xbf16, #tpu.memory_space<vmem>>, %arg3: memref<1x1024xf32, #tpu.memory_space<vmem>>, %arg4: memref<512x256xbf16, #tpu.memory_space<vmem>>, %arg5: memref<1x256xf32, #tpu.memory_space<vmem>>, %arg6: memref<256x128xbf16, #tpu.memory_space<vmem>>, %arg7: memref<1x128xf32, #tpu.memory_space<vmem>>, %arg8: memref<8x128xbf16, #tpu.memory_space<vmem>>) attributes {dimension_semantics = [#tpu.dimension_semantics<parallel>], iteration_bounds = array<i64: 1>, scalar_prefetch = 0 : i64, scratch_operands = 0 : i64, tpu.core_type = #tpu.core_type<tc>, window_params = [{transform_indices = @transform_0, window_bounds = array<i64: 8, 8>}, {pipeline_mode = #tpu.pipeline_mode<synchronous>, transform_indices = @transform_1, window_bounds = array<i64: 8, 1024>}, {pipeline_mode = #tpu.pipeline_mode<synchronous>, transform_indices = @transform_2, window_bounds = array<i64: 1, 1024>}, {pipeline_mode = #tpu.pipeline_mode<synchronous>, transform_indices = @transform_3, window_bounds = array<i64: 512, 256>}, {pipeline_mode = #tpu.pipeline_mode<synchronous>, transform_indices = @transform_4, window_bounds = array<i64: 1, 256>}, {pipeline_mode = #tpu.pipeline_mode<synchronous>, transform_indices = @transform_5, window_bounds = array<i64: 256, 128>}, {pipeline_mode = #tpu.pipeline_mode<synchronous>, transform_indices = @transform_6, window_bounds = array<i64: 1, 128>}, {transform_indices = @transform_7, window_bounds = array<i64: 8, 128>}]} {
    %c0 = arith.constant 0 : index
    %c0_0 = arith.constant 0 : index
    %0 = vector.load %arg1[%c0, %c0_0] : memref<8x8xf32, #tpu.memory_space<vmem>>, vector<8x8xf32>
    %1 = arith.truncf %0 : vector<8x8xf32> to vector<8x8xbf16>
    %c0_1 = arith.constant 0 : index
    %c0_2 = arith.constant 0 : index
    %2 = vector.load %arg2[%c0_1, %c0_2] : memref<8x1024xbf16, #tpu.memory_space<vmem>>, vector<8x1024xbf16>
    %cst = arith.constant dense<0.000000e+00> : vector<8x1024xf32>
    %3 = tpu.matmul %1, %2, %cst {dimension_numbers = #tpu.dot_dimension_numbers<[1], [0], [0], [1], [0, 0, 1, 1], [], []>} : vector<8x8xbf16>, vector<8x1024xbf16>, vector<8x1024xf32> -> vector<8x1024xf32>
    %4 = arith.truncf %3 : vector<8x1024xf32> to vector<8x1024xbf16>
    %c0_3 = arith.constant 0 : index
    %c0_4 = arith.constant 0 : index
    %5 = vector.load %arg3[%c0_3, %c0_4] : memref<1x1024xf32, #tpu.memory_space<vmem>>, vector<1x1024xf32>
    %6 = arith.truncf %5 : vector<1x1024xf32> to vector<1x1024xbf16>
    %7 = vector.broadcast %6 : vector<1x1024xbf16> to vector<8x1024xbf16>
    %8 = arith.addf %4, %7 : vector<8x1024xbf16>
    %9 = vector.extract_strided_slice %8 {offsets = [0, 0], sizes = [8, 512], strides = [1, 1]} : vector<8x1024xbf16> to vector<8x512xbf16>
    %cst_5 = arith.constant 0.000000e+00 : bf16
    %10 = vector.broadcast %cst_5 : bf16 to vector<8x512xbf16>
    %11 = arith.maximumf %9, %10 : vector<8x512xbf16>
    %12 = vector.extract_strided_slice %8 {offsets = [0, 512], sizes = [8, 512], strides = [1, 1]} : vector<8x1024xbf16> to vector<8x512xbf16>
    %cst_6 = arith.constant 0.000000e+00 : bf16
    %13 = vector.broadcast %cst_6 : bf16 to vector<8x512xbf16>
    %14 = arith.maximumf %12, %13 : vector<8x512xbf16>
    %15 = arith.addf %11, %14 : vector<8x512xbf16>
    %c0_7 = arith.constant 0 : index
    %c0_8 = arith.constant 0 : index
    %16 = vector.load %arg4[%c0_7, %c0_8] : memref<512x256xbf16, #tpu.memory_space<vmem>>, vector<512x256xbf16>
    %cst_9 = arith.constant dense<0.000000e+00> : vector<8x256xf32>
    %17 = tpu.matmul %15, %16, %cst_9 {dimension_numbers = #tpu.dot_dimension_numbers<[1], [0], [0], [1], [0, 0, 1, 1], [], []>} : vector<8x512xbf16>, vector<512x256xbf16>, vector<8x256xf32> -> vector<8x256xf32>
    %18 = arith.truncf %17 : vector<8x256xf32> to vector<8x256xbf16>
    %c0_10 = arith.constant 0 : index
    %c0_11 = arith.constant 0 : index
    %19 = vector.load %arg5[%c0_10, %c0_11] : memref<1x256xf32, #tpu.memory_space<vmem>>, vector<1x256xf32>
    %20 = arith.truncf %19 : vector<1x256xf32> to vector<1x256xbf16>
    %21 = vector.broadcast %20 : vector<1x256xbf16> to vector<8x256xbf16>
    %22 = arith.addf %18, %21 : vector<8x256xbf16>
    %cst_12 = arith.constant 0.000000e+00 : bf16
    %23 = vector.broadcast %cst_12 : bf16 to vector<8x256xbf16>
    %24 = arith.maximumf %22, %23 : vector<8x256xbf16>
    %c0_13 = arith.constant 0 : index
    %c0_14 = arith.constant 0 : index
    %25 = vector.load %arg6[%c0_13, %c0_14] : memref<256x128xbf16, #tpu.memory_space<vmem>>, vector<256x128xbf16>
    %cst_15 = arith.constant dense<0.000000e+00> : vector<8x128xf32>
    %26 = tpu.matmul %24, %25, %cst_15 {dimension_numbers = #tpu.dot_dimension_numbers<[1], [0], [0], [1], [0, 0, 1, 1], [], []>} : vector<8x256xbf16>, vector<256x128xbf16>, vector<8x128xf32> -> vector<8x128xf32>
    %c0_16 = arith.constant 0 : index
    %c0_17 = arith.constant 0 : index
    %27 = vector.load %arg7[%c0_16, %c0_17] : memref<1x128xf32, #tpu.memory_space<vmem>>, vector<1x128xf32>
    %28 = vector.broadcast %27 : vector<1x128xf32> to vector<8x128xf32>
    %29 = arith.addf %26, %28 : vector<8x128xf32>
    %30 = arith.truncf %29 : vector<8x128xf32> to vector<8x128xbf16>
    %c0_18 = arith.constant 0 : index
    %c0_19 = arith.constant 0 : index
    %31 = vector.load %arg8[%c0_18, %c0_19] : memref<8x128xbf16, #tpu.memory_space<vmem>>, vector<8x128xbf16>
    tpu.vector_store %arg8[%c0_18, %c0_19], %30 {strides = array<i32>} : memref<8x128xbf16, #tpu.memory_space<vmem>>, vector<8x128xbf16>,
    return
  }
  func.func @transform_0(%arg0: i32) -> (i32, i32) {
    %c0_i32 = arith.constant 0 : i32
    %c0_i32_0 = arith.constant 0 : i32
    return %arg0, %c0_i32 : i32, i32
  }
  func.func @transform_1(%arg0: i32) -> (i32, i32) {
    %c0_i32 = arith.constant 0 : i32
    %c0_i32_0 = arith.constant 0 : i32
    %c0_i32_1 = arith.constant 0 : i32
    return %c0_i32, %c0_i32_0 : i32, i32
  }
  func.func @transform_2(%arg0: i32) -> (i32, i32) {
    %c0_i32 = arith.constant 0 : i32
    %c0_i32_0 = arith.constant 0 : i32
    %c0_i32_1 = arith.constant 0 : i32
    return %c0_i32, %c0_i32_0 : i32, i32
  }
  func.func @transform_3(%arg0: i32) -> (i32, i32) {
    %c0_i32 = arith.constant 0 : i32
    %c0_i32_0 = arith.constant 0 : i32
    %c0_i32_1 = arith.constant 0 : i32
    return %c0_i32, %c0_i32_0 : i32, i32
  }
  func.func @transform_4(%arg0: i32) -> (i32, i32) {
    %c0_i32 = arith.constant 0 : i32
    %c0_i32_0 = arith.constant 0 : i32
    %c0_i32_1 = arith.constant 0 : i32
    return %c0_i32, %c0_i32_0 : i32, i32
  }
  func.func @transform_5(%arg0: i32) -> (i32, i32) {
    %c0_i32 = arith.constant 0 : i32
    %c0_i32_0 = arith.constant 0 : i32
    %c0_i32_1 = arith.constant 0 : i32
    return %c0_i32, %c0_i32_0 : i32, i32
  }
  func.func @transform_6(%arg0: i32) -> (i32, i32) {
    %c0_i32 = arith.constant 0 : i32
    %c0_i32_0 = arith.constant 0 : i32
    %c0_i32_1 = arith.constant 0 : i32
    return %c0_i32, %c0_i32_0 : i32, i32
  }
  func.func @transform_7(%arg0: i32) -> (i32, i32) {
    %c0_i32 = arith.constant 0 : i32
    %c0_i32_0 = arith.constant 0 : i32
    return %arg0, %c0_i32 : i32, i32
  }
}

</mosaic_0001>

<llo_original>
// kernel: tpu_custom_call.1
$region0: #{tpu_custom_call.1}
  #allocation0 [shape = 'u32[]', space=smem, size = 0x4, offset = 0x4, fixed_abs, tag = 'smem constant byte address 0x4 - core index']
  #allocation1 [shape = 'u32[144,128]{1,0:T(1,128)}', space=vmem, size = 0x12000, scoped, tag = 'internal scratch']
  %s0 = inlined_call_operand.hbm [shape: f32[8,8], index: 0, kind: input, shape index: {}]
  %s1 = inlined_call_operand.hbm [shape: bf16[8,1024], index: 1, kind: input, shape index: {}]
  %s2 = inlined_call_operand.hbm [shape: f32[1,1024], index: 2, kind: input, shape index: {}]
  %s3 = inlined_call_operand.hbm [shape: bf16[512,256], index: 3, kind: input, shape index: {}]
  %s4 = inlined_call_operand.vmem [shape: f32[1,256], index: 4, kind: input, shape index: {}]
  %s5 = inlined_call_operand.hbm [shape: bf16[256,128], index: 5, kind: input, shape index: {}]
  %s6 = inlined_call_operand.vmem [shape: f32[1,128], index: 6, kind: input, shape index: {}]
  %s7 = inlined_call_operand.hbm [shape: bf16[8,128], index: 7, kind: output, shape index: {}]
  %s8 = sld [smem:[#allocation0]]
  $region58: #{tpu_custom_call.1} parent=0
    _
  %s10 = ssub.s32 1, %s8
  %s11 = scalar_select 0, %s10, %s8
  $region1: #{tpu_custom_call.1} parent=0
    #allocation2 [shape = 'u8[4096]{0}', space=vmem, size = 0x1000, scoped, tag = 'input window, operand 0, single buffered']
    #allocation3 [shape = 's32[1]{0}', space=sflag, size = 0x4, scoped, tag = 'scoped memory for tpu_custom_call.1']
    #allocation4 [shape = 's32[1]{0}', space=sflag, size = 0x4, scoped, tag = 'scoped memory for tpu_custom_call.1']
    #allocation5 [shape = 'u8[16384]{0}', space=vmem, size = 0x4000, scoped, tag = 'input window, operand 1, single buffered']
    #allocation6 [shape = 's32[1]{0}', space=sflag, size = 0x4, scoped, tag = 'scoped memory for tpu_custom_call.1']
    #allocation7 [shape = 'u8[4096]{0}', space=vmem, size = 0x1000, scoped, tag = 'input window, operand 2, single buffered']
    #allocation8 [shape = 'u8[262144]{0}', space=vmem, size = 0x40000, scoped, tag = 'input window, operand 3, single buffered']
    #allocation9 [shape = 's32[1]{0}', space=sflag, size = 0x4, scoped, tag = 'scoped memory for tpu_custom_call.1']
    #allocation10 [shape = 'u8[65536]{0}', space=vmem, size = 0x10000, scoped, tag = 'input window, operand 5, single buffered']
    #allocation11 [shape = 'u8[2048]{0}', space=vmem, size = 0x800, scoped, tag = 'output window, operand 0, single buffered']
    %12 = vsyncpa [#allocation3], 0
    %13 = vsyncpa [#allocation6], 0
    %14 = vsyncpa [#allocation9], 0
    %15 = vsyncpa [#allocation4], 0
    // Predicated region
    $region2: #{tpu_custom_call.1} parent=1 // pred_check
      _
    $region3: #{tpu_custom_call.1} parent=1 // pred_check_branch
      %17 = sbr.rel (0) target = $region5
    $region4: #{tpu_custom_call.1} parent=1 // pred_region
      %s19 = ssub.s32 128, 128
      %20 = vsyncadd [#allocation3], %s19
      %s22 = sshll.u32 [#allocation2], 4
      %s23 = int_to_ptr.vmem [resolvable:$true] %s22
      %25 = dma.hbm_to_vmem [thread:$0]  %s0, 128, %s23, [#allocation3]
    $region5: #{tpu_custom_call.1} parent=1 // pred_fallthru
      _
    // Predicated region
    $region6: #{tpu_custom_call.1} parent=1 // pred_check
      _
    $region7: #{tpu_custom_call.1} parent=1 // pred_check_branch
      %27 = sbr.rel (0) target = $region9
    $region8: #{tpu_custom_call.1} parent=1 // pred_region
      %s29 = ssub.s32 512, 512
      %30 = vsyncadd [#allocation6], %s29
      %s32 = sshll.u32 [#allocation5], 4
      %s33 = int_to_ptr.vmem [resolvable:$true] %s32
      %35 = dma.hbm_to_vmem [thread:$0]  %s1, 512, %s33, [#allocation6]
    $region9: #{tpu_custom_call.1} parent=1 // pred_fallthru
      _
    // Predicated region
    $region10: #{tpu_custom_call.1} parent=1 // pred_check
      _
    $region11: #{tpu_custom_call.1} parent=1 // pred_check_branch
      %37 = sbr.rel (0) target = $region13
    $region12: #{tpu_custom_call.1} parent=1 // pred_region
      %s39 = ssub.s32 128, 128
      %40 = vsyncadd [#allocation6], %s39
      %s42 = sshll.u32 [#allocation7], 4
      %s43 = int_to_ptr.vmem [resolvable:$true] %s42
      %45 = dma.hbm_to_vmem [thread:$0]  %s2, 128, %s43, [#allocation6]
    $region13: #{tpu_custom_call.1} parent=1 // pred_fallthru
      _
    // Predicated region
    $region14: #{tpu_custom_call.1} parent=1 // pred_check
      _
    $region15: #{tpu_custom_call.1} parent=1 // pred_check_branch
      %47 = sbr.rel (0) target = $region17
    $region16: #{tpu_custom_call.1} parent=1 // pred_region
      %s49 = ssub.s32 8192, 8192
      %50 = vsyncadd [#allocation9], %s49
      %s51 = sshll.u32 [#allocation8], 4
      %s52 = int_to_ptr.vmem [resolvable:$true] %s51
      %57 = dma.hbm_to_vmem [thread:$0]  %s3, 8192, %s52, [#allocation9], 128, 128, 8
    $region17: #{tpu_custom_call.1} parent=1 // pred_fallthru
      _
    // Predicated region
    $region18: #{tpu_custom_call.1} parent=1 // pred_check
      _
    $region19: #{tpu_custom_call.1} parent=1 // pred_check_branch
      %59 = sbr.rel (0) target = $region21
    $region20: #{tpu_custom_call.1} parent=1 // pred_region
      _
    $region21: #{tpu_custom_call.1} parent=1 // pred_fallthru
      _
    // Predicated region
    $region22: #{tpu_custom_call.1} parent=1 // pred_check
      _
    $region23: #{tpu_custom_call.1} parent=1 // pred_check_branch
      %61 = sbr.rel (0) target = $region25
    $region24: #{tpu_custom_call.1} parent=1 // pred_region
      %s63 = ssub.s32 2048, 2048
      %64 = vsyncadd [#allocation9], %s63
      %s65 = sshll.u32 [#allocation10], 4
      %s66 = int_to_ptr.vmem [resolvable:$true] %s65
      %71 = dma.hbm_to_vmem [thread:$0]  %s5, 2048, %s66, [#allocation9], 64, 64, 4
    $region25: #{tpu_custom_call.1} parent=1 // pred_fallthru
      _
    // Predicated region
    $region26: #{tpu_custom_call.1} parent=1 // pred_check
      _
    $region27: #{tpu_custom_call.1} parent=1 // pred_check_branch
      %73 = sbr.rel (0) target = $region29
    $region28: #{tpu_custom_call.1} parent=1 // pred_region
      _
    $region29: #{tpu_custom_call.1} parent=1 // pred_fallthru
      _
    // Predicated region
    $region30: #{tpu_custom_call.1} parent=1 // pred_check
      _
    $region31: #{tpu_custom_call.1} parent=1 // pred_check_branch
      %75 = sbr.rel (0) target = $region33
    $region32: #{tpu_custom_call.1} parent=1 // pred_region
      %76 = dma.done [#allocation3], 128
    $region33: #{tpu_custom_call.1} parent=1 // pred_fallthru
      _
    // Predicated region
    $region34: #{tpu_custom_call.1} parent=1 // pred_check
      _
    $region35: #{tpu_custom_call.1} parent=1 // pred_check_branch
      %78 = sbr.rel (0) target = $region37
    $region36: #{tpu_custom_call.1} parent=1 // pred_region
      %79 = dma.done [#allocation6], 512
    $region37: #{tpu_custom_call.1} parent=1 // pred_fallthru
      _
    // Predicated region
    $region38: #{tpu_custom_call.1} parent=1 // pred_check
      _
    $region39: #{tpu_custom_call.1} parent=1 // pred_check_branch
      %81 = sbr.rel (0) target = $region41
    $region40: #{tpu_custom_call.1} parent=1 // pred_region
      %82 = dma.done [#allocation6], 128
    $region41: #{tpu_custom_call.1} parent=1 // pred_fallthru
      _
    // Predicated region
    $region42: #{tpu_custom_call.1} parent=1 // pred_check
      _
    $region43: #{tpu_custom_call.1} parent=1 // pred_check_branch
      %84 = sbr.rel (0) target = $region45
    $region44: #{tpu_custom_call.1} parent=1 // pred_region
      %85 = dma.done [#allocation9], 8192
    $region45: #{tpu_custom_call.1} parent=1 // pred_fallthru
      _
    // Predicated region
    $region46: #{tpu_custom_call.1} parent=1 // pred_check
      _
    $region47: #{tpu_custom_call.1} parent=1 // pred_check_branch
      %87 = sbr.rel (0) target = $region49
    $region48: #{tpu_custom_call.1} parent=1 // pred_region
      %88 = dma.done [#allocation9], 2048
    $region49: #{tpu_custom_call.1} parent=1 // pred_fallthru
      _
    %v90 = vld [vmem:[#allocation2] sm:$0xff]
    %v91 = vpack.c.bf16 %v90, %v90
    %v92 = vld [vmem:[#allocation5] sm:$0xff]
    %v93 = vld [vmem:[#allocation5 + $0x8] sm:$0xff]
    %v94 = vld [vmem:[#allocation5 + $0x10] sm:$0xff]
    %v95 = vld [vmem:[#allocation5 + $0x18] sm:$0xff]
    %v100 = vunpack.c.l.b16 %v92
    %v101 = vunpack.c.h.b16 %v92
    %v102 = vunpack.c.l.b16 %v93
    %v103 = vunpack.c.h.b16 %v93
    %v104 = vunpack.c.l.b16 %v94
    %v105 = vunpack.c.h.b16 %v94
    %v106 = vunpack.c.l.b16 %v95
    %v107 = vunpack.c.h.b16 %v95
    %v108 = vpack.c.b16 %v100, %v100
    %v109 = vpack.c.b16 %v101, %v101
    %v110 = vpack.c.b16 %v102, %v102
    %v111 = vpack.c.b16 %v103, %v103
    %v112 = vpack.c.b16 %v104, %v104
    %v113 = vpack.c.b16 %v105, %v105
    %v114 = vpack.c.b16 %v106, %v106
    %v115 = vpack.c.b16 %v107, %v107
    %vm116 = vcmask 64512
    %v118 = vsel %vm116, %v91, 0
    %vm120 = vcmask 1043456
    %v122 = vsel %vm120, %v108, 0
    %v125 = vsel %vm120, %v109, 0
    %v128 = vsel %vm120, %v110, 0
    %v131 = vsel %vm120, %v111, 0
    %v134 = vsel %vm120, %v112, 0
    %v137 = vsel %vm120, %v113, 0
    %v140 = vsel %vm120, %v114, 0
    %v143 = vsel %vm120, %v115, 0
    %145 = vmatprep.subr.bf16.mxu0 %v125
    %146 = vmatpush1.bf16.msra.mxu0 %v122
    %147 = vmatprep.subr.bf16.mxu0 0
    %148 = vmatpush1.bf16.msra.mxu0 0
    %149 = vmatprep.subr.bf16.mxu0 0
    %150 = vmatpush1.bf16.msra.mxu0 0
    %151 = vmatprep.subr.bf16.mxu0 0
    %152 = vmatpush1.bf16.msra.mxu0 0
    %153 = vmatprep.subr.bf16.mxu0 0
    %154 = vmatpush1.bf16.msra.mxu0 0
    %155 = vmatprep.subr.bf16.mxu0 0
    %156 = vmatpush1.bf16.msra.mxu0 0
    %157 = vmatprep.subr.bf16.mxu0 0
    %158 = vmatpush1.bf16.msra.mxu0 0
    %159 = vmatprep.subr.bf16.mxu0 0
    %160 = vmatpush1.bf16.msra.mxu0 0
    %161 = vmatprep.subr.bf16.mxu0 0
    %162 = vmatpush1.bf16.msra.mxu0 0
    %163 = vmatprep.subr.bf16.mxu0 0
    %164 = vmatpush1.bf16.msra.mxu0 0
    %165 = vmatprep.subr.bf16.mxu0 0
    %166 = vmatpush1.bf16.msra.mxu0 0
    %167 = vmatprep.subr.bf16.mxu0 0
    %168 = vmatpush1.bf16.msra.mxu0 0
    %169 = vmatprep.subr.bf16.mxu0 0
    %170 = vmatpush1.bf16.msra.mxu0 0
    %171 = vmatprep.subr.bf16.mxu0 0
    %172 = vmatpush1.bf16.msra.mxu0 0
    %173 = vmatprep.subr.bf16.mxu0 0
    %174 = vmatpush1.bf16.msra.mxu0 0
    %175 = vmatprep.subr.bf16.mxu0 0
    %176 = vmatpush1.bf16.msra.mxu0 0
    %177 = vmatprep.mubr.bf16.mxu0 0
    %178 = vmatmul.mubr.bf16.gmra.mrb[0].mxu0 %v118
    %v179 = vpop.f32.mrb[0].mxu0
    %v180 = vadd.f32 0.0, %v179
    %v181 = vpop.f32.mrb[0].mxu0
    %v182 = vadd.f32 0.0, %v181
    %v183 = vpop.f32.mrb[0].mxu0
    %v184 = vpop.f32.mrb[0].mxu0
    %185 = vdwg.mxu0
    %186 = vmatprep.subr.bf16.mxu0 %v131
    %187 = vmatpush1.bf16.msra.mxu0 %v128
    %188 = vmatprep.subr.bf16.mxu0 0
    %189 = vmatpush1.bf16.msra.mxu0 0
    %190 = vmatprep.subr.bf16.mxu0 0
    %191 = vmatpush1.bf16.msra.mxu0 0
    %192 = vmatprep.subr.bf16.mxu0 0
    %193 = vmatpush1.bf16.msra.mxu0 0
    %194 = vmatprep.subr.bf16.mxu0 0
    %195 = vmatpush1.bf16.msra.mxu0 0
    %196 = vmatprep.subr.bf16.mxu0 0
    %197 = vmatpush1.bf16.msra.mxu0 0
    %198 = vmatprep.subr.bf16.mxu0 0
    %199 = vmatpush1.bf16.msra.mxu0 0
    %200 = vmatprep.subr.bf16.mxu0 0
    %201 = vmatpush1.bf16.msra.mxu0 0
    %202 = vmatprep.subr.bf16.mxu0 0
    %203 = vmatpush1.bf16.msra.mxu0 0
    %204 = vmatprep.subr.bf16.mxu0 0
    %205 = vmatpush1.bf16.msra.mxu0 0
    %206 = vmatprep.subr.bf16.mxu0 0
    %207 = vmatpush1.bf16.msra.mxu0 0
    %208 = vmatprep.subr.bf16.mxu0 0
    %209 = vmatpush1.bf16.msra.mxu0 0
    %210 = vmatprep.subr.bf16.mxu0 0
    %211 = vmatpush1.bf16.msra.mxu0 0
    %212 = vmatprep.subr.bf16.mxu0 0
    %213 = vmatpush1.bf16.msra.mxu0 0
    %214 = vmatprep.subr.bf16.mxu0 0
    %215 = vmatpush1.bf16.msra.mxu0 0
    %216 = vmatprep.subr.bf16.mxu0 0
    %217 = vmatpush1.bf16.msra.mxu0 0
    %218 = vmatprep.mubr.bf16.mxu0 0
    %219 = vmatmul.mubr.bf16.gmra.mrb[0].mxu0 %v118
    %v220 = vpop.f32.mrb[0].mxu0
    %v221 = vadd.f32 0.0, %v220
    %v222 = vpop.f32.mrb[0].mxu0
    %v223 = vadd.f32 0.0, %v222
    %v224 = vpop.f32.mrb[0].mxu0
    %v225 = vpop.f32.mrb[0].mxu0
    %226 = vdwg.mxu0
    %227 = vmatprep.subr.bf16.mxu0 %v137
    %228 = vmatpush1.bf16.msra.mxu0 %v134
    %229 = vmatprep.subr.bf16.mxu0 0
    %230 = vmatpush1.bf16.msra.mxu0 0
    %231 = vmatprep.subr.bf16.mxu0 0
    %232 = vmatpush1.bf16.msra.mxu0 0
    %233 = vmatprep.subr.bf16.mxu0 0
    %234 = vmatpush1.bf16.msra.mxu0 0
    %235 = vmatprep.subr.bf16.mxu0 0
    %236 = vmatpush1.bf16.msra.mxu0 0
    %237 = vmatprep.subr.bf16.mxu0 0
    %238 = vmatpush1.bf16.msra.mxu0 0
    %239 = vmatprep.subr.bf16.mxu0 0
    %240 = vmatpush1.bf16.msra.mxu0 0
    %241 = vmatprep.subr.bf16.mxu0 0
    %242 = vmatpush1.bf16.msra.mxu0 0
    %243 = vmatprep.subr.bf16.mxu0 0
    %244 = vmatpush1.bf16.msra.mxu0 0
    %245 = vmatprep.subr.bf16.mxu0 0
    %246 = vmatpush1.bf16.msra.mxu0 0
    %247 = vmatprep.subr.bf16.mxu0 0
    %248 = vmatpush1.bf16.msra.mxu0 0
    %249 = vmatprep.subr.bf16.mxu0 0
    %250 = vmatpush1.bf16.msra.mxu0 0
    %251 = vmatprep.subr.bf16.mxu0 0
    %252 = vmatpush1.bf16.msra.mxu0 0
    %253 = vmatprep.subr.bf16.mxu0 0
    %254 = vmatpush1.bf16.msra.mxu0 0
    %255 = vmatprep.subr.bf16.mxu0 0
    %256 = vmatpush1.bf16.msra.mxu0 0
    %257 = vmatprep.subr.bf16.mxu0 0
    %258 = vmatpush1.bf16.msra.mxu0 0
    %259 = vmatprep.mubr.bf16.mxu0 0
    %260 = vmatmul.mubr.bf16.gmra.mrb[0].mxu0 %v118
    %v261 = vpop.f32.mrb[0].mxu0
    %v262 = vadd.f32 0.0, %v261
    %v263 = vpop.f32.mrb[0].mxu0
    %v264 = vadd.f32 0.0, %v263
    %v265 = vpop.f32.mrb[0].mxu0
    %v266 = vpop.f32.mrb[0].mxu0
    %267 = vdwg.mxu0
    %268 = vmatprep.subr.bf16.mxu0 %v143
    %269 = vmatpush1.bf16.msra.mxu0 %v140
    %270 = vmatprep.subr.bf16.mxu0 0
    %271 = vmatpush1.bf16.msra.mxu0 0
    %272 = vmatprep.subr.bf16.mxu0 0
    %273 = vmatpush1.bf16.msra.mxu0 0
    %274 = vmatprep.subr.bf16.mxu0 0
    %275 = vmatpush1.bf16.msra.mxu0 0
    %276 = vmatprep.subr.bf16.mxu0 0
    %277 = vmatpush1.bf16.msra.mxu0 0
    %278 = vmatprep.subr.bf16.mxu0 0
    %279 = vmatpush1.bf16.msra.mxu0 0
    %280 = vmatprep.subr.bf16.mxu0 0
    %281 = vmatpush1.bf16.msra.mxu0 0
    %282 = vmatprep.subr.bf16.mxu0 0
    %283 = vmatpush1.bf16.msra.mxu0 0
    %284 = vmatprep.subr.bf16.mxu0 0
    %285 = vmatpush1.bf16.msra.mxu0 0
    %286 = vmatprep.subr.bf16.mxu0 0
    %287 = vmatpush1.bf16.msra.mxu0 0
    %288 = vmatprep.subr.bf16.mxu0 0
    %289 = vmatpush1.bf16.msra.mxu0 0
    %290 = vmatprep.subr.bf16.mxu0 0
    %291 = vmatpush1.bf16.msra.mxu0 0
    %292 = vmatprep.subr.bf16.mxu0 0
    %293 = vmatpush1.bf16.msra.mxu0 0
    %294 = vmatprep.subr.bf16.mxu0 0
    %295 = vmatpush1.bf16.msra.mxu0 0
    %296 = vmatprep.subr.bf16.mxu0 0
    %297 = vmatpush1.bf16.msra.mxu0 0
    %298 = vmatprep.subr.bf16.mxu0 0
    %299 = vmatpush1.bf16.msra.mxu0 0
    %300 = vmatprep.mubr.bf16.mxu0 0
    %301 = vmatmul.mubr.bf16.gmra.mrb[0].mxu0 %v118
    %v302 = vpop.f32.mrb[0].mxu0
    %v303 = vadd.f32 0.0, %v302
    %v304 = vpop.f32.mrb[0].mxu0
    %v305 = vadd.f32 0.0, %v304
    %v306 = vpop.f32.mrb[0].mxu0
    %v307 = vpop.f32.mrb[0].mxu0
    %308 = vdwg.mxu0
    %v309 = vpack.c.bf16 %v180, %v180
    %v310 = vpack.c.bf16 %v182, %v182
    %v311 = vpack.c.bf16 %v221, %v221
    %v312 = vpack.c.bf16 %v223, %v223
    %v313 = vpack.c.bf16 %v262, %v262
    %v314 = vpack.c.bf16 %v264, %v264
    %v315 = vpack.c.bf16 %v303, %v303
    %v316 = vpack.c.bf16 %v305, %v305
    %v317 = vld [vmem:[#allocation7] sm:$0xff]
    %v319 = vlaneseq
    %v320 = vshrl.u32 %v319, 7
    %v321 = vsub.s32 0, %v320
    %v322 = vrot.slane %v317, %v321
    %v323 = vlaneseq
    %v324 = vshrl.u32 %v323, 7
    %v325 = vsub.s32 1, %v324
    %v326 = vrot.slane %v317, %v325
    %v327 = vlaneseq
    %v328 = vshrl.u32 %v327, 7
    %v329 = vsub.s32 2, %v328
    %v330 = vrot.slane %v317, %v329
    %v331 = vlaneseq
    %v332 = vshrl.u32 %v331, 7
    %v333 = vsub.s32 3, %v332
    %v334 = vrot.slane %v317, %v333
    %v335 = vlaneseq
    %v336 = vshrl.u32 %v335, 7
    %v337 = vsub.s32 4, %v336
    %v338 = vrot.slane %v317, %v337
    %v339 = vlaneseq
    %v340 = vshrl.u32 %v339, 7
    %v341 = vsub.s32 5, %v340
    %v342 = vrot.slane %v317, %v341
    %v343 = vlaneseq
    %v344 = vshrl.u32 %v343, 7
    %v345 = vsub.s32 6, %v344
    %v346 = vrot.slane %v317, %v345
    %v347 = vlaneseq
    %v348 = vshrl.u32 %v347, 7
    %v349 = vsub.s32 7, %v348
    %v350 = vrot.slane %v317, %v349
    %v359 = vpack.c.bf16 %v322, %v322
    %v360 = vpack.c.bf16 %v326, %v326
    %v361 = vpack.c.bf16 %v330, %v330
    %v362 = vpack.c.bf16 %v334, %v334
    %v363 = vpack.c.bf16 %v338, %v338
    %v364 = vpack.c.bf16 %v342, %v342
    %v365 = vpack.c.bf16 %v346, %v346
    %v366 = vpack.c.bf16 %v350, %v350
    %v368 = vpack.i.b16 %v359, %v359
    %v370 = vlaneseq
    %v371 = vshrl.u32 %v370, 7
    %v372 = vsub.s32 0, %v371
    %v373 = vrot.slane %v368, %v372
    %v375 = vpack.i.b16 %v360, %v360
    %v377 = vlaneseq
    %v378 = vshrl.u32 %v377, 7
    %v379 = vsub.s32 0, %v378
    %v380 = vrot.slane %v375, %v379
    %v382 = vpack.i.b16 %v361, %v361
    %v384 = vlaneseq
    %v385 = vshrl.u32 %v384, 7
    %v386 = vsub.s32 0, %v385
    %v387 = vrot.slane %v382, %v386
    %v389 = vpack.i.b16 %v362, %v362
    %v391 = vlaneseq
    %v392 = vshrl.u32 %v391, 7
    %v393 = vsub.s32 0, %v392
    %v394 = vrot.slane %v389, %v393
    %v396 = vpack.i.b16 %v363, %v363
    %v398 = vlaneseq
    %v399 = vshrl.u32 %v398, 7
    %v400 = vsub.s32 0, %v399
    %v401 = vrot.slane %v396, %v400
    %v403 = vpack.i.b16 %v364, %v364
    %v405 = vlaneseq
    %v406 = vshrl.u32 %v405, 7
    %v407 = vsub.s32 0, %v406
    %v408 = vrot.slane %v403, %v407
    %v410 = vpack.i.b16 %v365, %v365
    %v412 = vlaneseq
    %v413 = vshrl.u32 %v412, 7
    %v414 = vsub.s32 0, %v413
    %v415 = vrot.slane %v410, %v414
    %v417 = vpack.i.b16 %v366, %v366
    %v419 = vlaneseq
    %v420 = vshrl.u32 %v419, 7
    %v421 = vsub.s32 0, %v420
    %v422 = vrot.slane %v417, %v421
    %v423 = vadd.bf16 %v309, %v373
    %v424 = vadd.bf16 %v310, %v380
    %v425 = vadd.bf16 %v311, %v387
    %v426 = vadd.bf16 %v312, %v394
    %v427 = vadd.bf16 %v313, %v401
    %v428 = vadd.bf16 %v314, %v408
    %v429 = vadd.bf16 %v315, %v415
    %v430 = vadd.bf16 %v316, %v422
    %v431 = vmax.bf16 %v423, 0
    %v432 = vmax.bf16 %v424, 0
    %v433 = vmax.bf16 %v425, 0
    %v434 = vmax.bf16 %v426, 0
    %v435 = vmax.bf16 %v427, 0
    %v436 = vmax.bf16 %v428, 0
    %v437 = vmax.bf16 %v429, 0
    %v438 = vmax.bf16 %v430, 0
    %v439 = vadd.bf16 %v431, %v435
    %v440 = vadd.bf16 %v432, %v436
    %v441 = vadd.bf16 %v433, %v437
    %v442 = vadd.bf16 %v434, %v438
    %v443 = vld [vmem:[#allocation8] sm:$0xff]
    %v444 = vld [vmem:[#allocation8 + $0x8] sm:$0xff]
    %v445 = vld [vmem:[#allocation8 + $0x10] sm:$0xff]
    %v446 = vld [vmem:[#allocation8 + $0x18] sm:$0xff]
    %v447 = vld [vmem:[#allocation8 + $0x20] sm:$0xff]
    %v448 = vld [vmem:[#allocation8 + $0x28] sm:$0xff]
    %v449 = vld [vmem:[#allocation8 + $0x30] sm:$0xff]
    %v450 = vld [vmem:[#allocation8 + $0x38] sm:$0xff]
    %v451 = vld [vmem:[#allocation8 + $0x40] sm:$0xff]
    %v452 = vld [vmem:[#allocation8 + $0x48] sm:$0xff]
    %v453 = vld [vmem:[#allocation8 + $0x50] sm:$0xff]
    %v454 = vld [vmem:[#allocation8 + $0x58] sm:$0xff]
    %v455 = vld [vmem:[#allocation8 + $0x60] sm:$0xff]
    %v456 = vld [vmem:[#allocation8 + $0x68] sm:$0xff]
    %v457 = vld [vmem:[#allocation8 + $0x70] sm:$0xff]
    %v458 = vld [vmem:[#allocation8 + $0x78] sm:$0xff]
    %v459 = vld [vmem:[#allocation8 + $0x80] sm:$0xff]
    %v460 = vld [vmem:[#allocation8 + $0x88] sm:$0xff]
    %v461 = vld [vmem:[#allocation8 + $0x90] sm:$0xff]
    %v462 = vld [vmem:[#allocation8 + $0x98] sm:$0xff]
    %v463 = vld [vmem:[#allocation8 + $0xa0] sm:$0xff]
    %v464 = vld [vmem:[#allocation8 + $0xa8] sm:$0xff]
    %v465 = vld [vmem:[#allocation8 + $0xb0] sm:$0xff]
    %v466 = vld [vmem:[#allocation8 + $0xb8] sm:$0xff]
    %v467 = vld [vmem:[#allocation8 + $0xc0] sm:$0xff]
    %v468 = vld [vmem:[#allocation8 + $0xc8] sm:$0xff]
    %v469 = vld [vmem:[#allocation8 + $0xd0] sm:$0xff]
    %v470 = vld [vmem:[#allocation8 + $0xd8] sm:$0xff]
    %v471 = vld [vmem:[#allocation8 + $0xe0] sm:$0xff]
    %v472 = vld [vmem:[#allocation8 + $0xe8] sm:$0xff]
    %v473 = vld [vmem:[#allocation8 + $0xf0] sm:$0xff]
    %v474 = vld [vmem:[#allocation8 + $0xf8] sm:$0xff]
    %v475 = vld [vmem:[#allocation8 + $0x100] sm:$0xff]
    %v476 = vld [vmem:[#allocation8 + $0x108] sm:$0xff]
    %v477 = vld [vmem:[#allocation8 + $0x110] sm:$0xff]
    %v478 = vld [vmem:[#allocation8 + $0x118] sm:$0xff]
    %v479 = vld [vmem:[#allocation8 + $0x120] sm:$0xff]
    %v480 = vld [vmem:[#allocation8 + $0x128] sm:$0xff]
    %v481 = vld [vmem:[#allocation8 + $0x130] sm:$0xff]
    %v482 = vld [vmem:[#allocation8 + $0x138] sm:$0xff]
    %v483 = vld [vmem:[#allocation8 + $0x140] sm:$0xff]
    %v484 = vld [vmem:[#allocation8 + $0x148] sm:$0xff]
    %v485 = vld [vmem:[#allocation8 + $0x150] sm:$0xff]
    %v486 = vld [vmem:[#allocation8 + $0x158] sm:$0xff]
    %v487 = vld [vmem:[#allocation8 + $0x160] sm:$0xff]
    %v488 = vld [vmem:[#allocation8 + $0x168] sm:$0xff]
    %v489 = vld [vmem:[#allocation8 + $0x170] sm:$0xff]
    %v490 = vld [vmem:[#allocation8 + $0x178] sm:$0xff]
    %v491 = vld [vmem:[#allocation8 + $0x180] sm:$0xff]
    %v492 = vld [vmem:[#allocation8 + $0x188] sm:$0xff]
    %v493 = vld [vmem:[#allocation8 + $0x190] sm:$0xff]
    %v494 = vld [vmem:[#allocation8 + $0x198] sm:$0xff]
    %v495 = vld [vmem:[#allocation8 + $0x1a0] sm:$0xff]
    %v496 = vld [vmem:[#allocation8 + $0x1a8] sm:$0xff]
    %v497 = vld [vmem:[#allocation8 + $0x1b0] sm:$0xff]
    %v498 = vld [vmem:[#allocation8 + $0x1b8] sm:$0xff]
    %v499 = vld [vmem:[#allocation8 + $0x1c0] sm:$0xff]
    %v500 = vld [vmem:[#allocation8 + $0x1c8] sm:$0xff]
    %v501 = vld [vmem:[#allocation8 + $0x1d0] sm:$0xff]
    %v502 = vld [vmem:[#allocation8 + $0x1d8] sm:$0xff]
    %v503 = vld [vmem:[#allocation8 + $0x1e0] sm:$0xff]
    %v504 = vld [vmem:[#allocation8 + $0x1e8] sm:$0xff]
    %v505 = vld [vmem:[#allocation8 + $0x1f0] sm:$0xff]
    %v506 = vld [vmem:[#allocation8 + $0x1f8] sm:$0xff]
    %v571 = vunpack.c.l.b16 %v443
    %v572 = vunpack.c.h.b16 %v443
    %v573 = vunpack.c.l.b16 %v444
    %v574 = vunpack.c.h.b16 %v444
    %v575 = vunpack.c.l.b16 %v445
    %v576 = vunpack.c.h.b16 %v445
    %v577 = vunpack.c.l.b16 %v446
    %v578 = vunpack.c.h.b16 %v446
    %v579 = vunpack.c.l.b16 %v447
    %v580 = vunpack.c.h.b16 %v447
    %v581 = vunpack.c.l.b16 %v448
    %v582 = vunpack.c.h.b16 %v448
    %v583 = vunpack.c.l.b16 %v449
    %v584 = vunpack.c.h.b16 %v449
    %v585 = vunpack.c.l.b16 %v450
    %v586 = vunpack.c.h.b16 %v450
    %v587 = vunpack.c.l.b16 %v451
    %v588 = vunpack.c.h.b16 %v451
    %v589 = vunpack.c.l.b16 %v452
    %v590 = vunpack.c.h.b16 %v452
    %v591 = vunpack.c.l.b16 %v453
    %v592 = vunpack.c.h.b16 %v453
    %v593 = vunpack.c.l.b16 %v454
    %v594 = vunpack.c.h.b16 %v454
    %v595 = vunpack.c.l.b16 %v455
    %v596 = vunpack.c.h.b16 %v455
    %v597 = vunpack.c.l.b16 %v456
    %v598 = vunpack.c.h.b16 %v456
    %v599 = vunpack.c.l.b16 %v457
    %v600 = vunpack.c.h.b16 %v457
    %v601 = vunpack.c.l.b16 %v458
    %v602 = vunpack.c.h.b16 %v458
    %v603 = vunpack.c.l.b16 %v459
    %v604 = vunpack.c.h.b16 %v459
    %v605 = vunpack.c.l.b16 %v460
    %v606 = vunpack.c.h.b16 %v460
    %v607 = vunpack.c.l.b16 %v461
    %v608 = vunpack.c.h.b16 %v461
    %v609 = vunpack.c.l.b16 %v462
    %v610 = vunpack.c.h.b16 %v462
    %v611 = vunpack.c.l.b16 %v463
    %v612 = vunpack.c.h.b16 %v463
    %v613 = vunpack.c.l.b16 %v464
    %v614 = vunpack.c.h.b16 %v464
    %v615 = vunpack.c.l.b16 %v465
    %v616 = vunpack.c.h.b16 %v465
    %v617 = vunpack.c.l.b16 %v466
    %v618 = vunpack.c.h.b16 %v466
    %v619 = vunpack.c.l.b16 %v467
    %v620 = vunpack.c.h.b16 %v467
    %v621 = vunpack.c.l.b16 %v468
    %v622 = vunpack.c.h.b16 %v468
    %v623 = vunpack.c.l.b16 %v469
    %v624 = vunpack.c.h.b16 %v469
    %v625 = vunpack.c.l.b16 %v470
    %v626 = vunpack.c.h.b16 %v470
    %v627 = vunpack.c.l.b16 %v471
    %v628 = vunpack.c.h.b16 %v471
    %v629 = vunpack.c.l.b16 %v472
    %v630 = vunpack.c.h.b16 %v472
    %v631 = vunpack.c.l.b16 %v473
    %v632 = vunpack.c.h.b16 %v473
    %v633 = vunpack.c.l.b16 %v474
    %v634 = vunpack.c.h.b16 %v474
    %v635 = vunpack.c.l.b16 %v475
    %v636 = vunpack.c.h.b16 %v475
    %v637 = vunpack.c.l.b16 %v476
    %v638 = vunpack.c.h.b16 %v476
    %v639 = vunpack.c.l.b16 %v477
    %v640 = vunpack.c.h.b16 %v477
    %v641 = vunpack.c.l.b16 %v478
    %v642 = vunpack.c.h.b16 %v478
    %v643 = vunpack.c.l.b16 %v479
    %v644 = vunpack.c.h.b16 %v479
    %v645 = vunpack.c.l.b16 %v480
    %v646 = vunpack.c.h.b16 %v480
    %v647 = vunpack.c.l.b16 %v481
    %v648 = vunpack.c.h.b16 %v481
    %v649 = vunpack.c.l.b16 %v482
    %v650 = vunpack.c.h.b16 %v482
    %v651 = vunpack.c.l.b16 %v483
    %v652 = vunpack.c.h.b16 %v483
    %v653 = vunpack.c.l.b16 %v484
    %v654 = vunpack.c.h.b16 %v484
    %v655 = vunpack.c.l.b16 %v485
    %v656 = vunpack.c.h.b16 %v485
    %v657 = vunpack.c.l.b16 %v486
    %v658 = vunpack.c.h.b16 %v486
    %v659 = vunpack.c.l.b16 %v487
    %v660 = vunpack.c.h.b16 %v487
    %v661 = vunpack.c.l.b16 %v488
    %v662 = vunpack.c.h.b16 %v488
    %v663 = vunpack.c.l.b16 %v489
    %v664 = vunpack.c.h.b16 %v489
    %v665 = vunpack.c.l.b16 %v490
    %v666 = vunpack.c.h.b16 %v490
    %v667 = vunpack.c.l.b16 %v491
    %v668 = vunpack.c.h.b16 %v491
    %v669 = vunpack.c.l.b16 %v492
    %v670 = vunpack.c.h.b16 %v492
    %v671 = vunpack.c.l.b16 %v493
    %v672 = vunpack.c.h.b16 %v493
    %v673 = vunpack.c.l.b16 %v494
    %v674 = vunpack.c.h.b16 %v494
    %v675 = vunpack.c.l.b16 %v495
    %v676 = vunpack.c.h.b16 %v495
    %v677 = vunpack.c.l.b16 %v496
    %v678 = vunpack.c.h.b16 %v496
    %v679 = vunpack.c.l.b16 %v497
    %v680 = vunpack.c.h.b16 %v497
    %v681 = vunpack.c.l.b16 %v498
    %v682 = vunpack.c.h.b16 %v498
    %v683 = vunpack.c.l.b16 %v499
    %v684 = vunpack.c.h.b16 %v499
    %v685 = vunpack.c.l.b16 %v500
    %v686 = vunpack.c.h.b16 %v500
    %v687 = vunpack.c.l.b16 %v501
    %v688 = vunpack.c.h.b16 %v501
    %v689 = vunpack.c.l.b16 %v502
    %v690 = vunpack.c.h.b16 %v502
    %v691 = vunpack.c.l.b16 %v503
    %v692 = vunpack.c.h.b16 %v503
    %v693 = vunpack.c.l.b16 %v504
    %v694 = vunpack.c.h.b16 %v504
    %v695 = vunpack.c.l.b16 %v505
    %v696 = vunpack.c.h.b16 %v505
    %v697 = vunpack.c.l.b16 %v506
    %v698 = vunpack.c.h.b16 %v506
    %v699 = vpack.c.b16 %v573, %v571
    %v700 = vpack.c.b16 %v574, %v572
    %v701 = vpack.c.b16 %v577, %v575
    %v702 = vpack.c.b16 %v578, %v576
    %v703 = vpack.c.b16 %v581, %v579
    %v704 = vpack.c.b16 %v582, %v580
    %v705 = vpack.c.b16 %v585, %v583
    %v706 = vpack.c.b16 %v586, %v584
    %v707 = vpack.c.b16 %v589, %v587
    %v708 = vpack.c.b16 %v590, %v588
    %v709 = vpack.c.b16 %v593, %v591
    %v710 = vpack.c.b16 %v594, %v592
    %v711 = vpack.c.b16 %v597, %v595
    %v712 = vpack.c.b16 %v598, %v596
    %v713 = vpack.c.b16 %v601, %v599
    %v714 = vpack.c.b16 %v602, %v600
    %v715 = vpack.c.b16 %v605, %v603
    %v716 = vpack.c.b16 %v606, %v604
    %v717 = vpack.c.b16 %v609, %v607
    %v718 = vpack.c.b16 %v610, %v608
    %v719 = vpack.c.b16 %v613, %v611
    %v720 = vpack.c.b16 %v614, %v612
    %v721 = vpack.c.b16 %v617, %v615
    %v722 = vpack.c.b16 %v618, %v616
    %v723 = vpack.c.b16 %v621, %v619
    %v724 = vpack.c.b16 %v622, %v620
    %v725 = vpack.c.b16 %v625, %v623
    %v726 = vpack.c.b16 %v626, %v624
    %v727 = vpack.c.b16 %v629, %v627
    %v728 = vpack.c.b16 %v630, %v628
    %v729 = vpack.c.b16 %v633, %v631
    %v730 = vpack.c.b16 %v634, %v632
    %v731 = vpack.c.b16 %v637, %v635
    %v732 = vpack.c.b16 %v638, %v636
    %v733 = vpack.c.b16 %v641, %v639
    %v734 = vpack.c.b16 %v642, %v640
    %v735 = vpack.c.b16 %v645, %v643
    %v736 = vpack.c.b16 %v646, %v644
    %v737 = vpack.c.b16 %v649, %v647
    %v738 = vpack.c.b16 %v650, %v648
    %v739 = vpack.c.b16 %v653, %v651
    %v740 = vpack.c.b16 %v654, %v652
    %v741 = vpack.c.b16 %v657, %v655
    %v742 = vpack.c.b16 %v658, %v656
    %v743 = vpack.c.b16 %v661, %v659
    %v744 = vpack.c.b16 %v662, %v660
    %v745 = vpack.c.b16 %v665, %v663
    %v746 = vpack.c.b16 %v666, %v664
    %v747 = vpack.c.b16 %v669, %v667
    %v748 = vpack.c.b16 %v670, %v668
    %v749 = vpack.c.b16 %v673, %v671
    %v750 = vpack.c.b16 %v674, %v672
    %v751 = vpack.c.b16 %v677, %v675
    %v752 = vpack.c.b16 %v678, %v676
    %v753 = vpack.c.b16 %v681, %v679
    %v754 = vpack.c.b16 %v682, %v680
    %v755 = vpack.c.b16 %v685, %v683
    %v756 = vpack.c.b16 %v686, %v684
    %v757 = vpack.c.b16 %v689, %v687
    %v758 = vpack.c.b16 %v690, %v688
    %v759 = vpack.c.b16 %v693, %v691
    %v760 = vpack.c.b16 %v694, %v692
    %v761 = vpack.c.b16 %v697, %v695
    %v762 = vpack.c.b16 %v698, %v696
    %827 = vmatprep.subr.bf16.mxu0 %v700
    %828 = vmatpush1.bf16.msra.mxu0 %v699
    %829 = vmatprep.subr.bf16.mxu0 %v702
    %830 = vmatpush1.bf16.msra.mxu0 %v701
    %831 = vmatprep.subr.bf16.mxu0 %v704
    %832 = vmatpush1.bf16.msra.mxu0 %v703
    %833 = vmatprep.subr.bf16.mxu0 %v706
    %834 = vmatpush1.bf16.msra.mxu0 %v705
    %835 = vmatprep.subr.bf16.mxu0 %v708
    %836 = vmatpush1.bf16.msra.mxu0 %v707
    %837 = vmatprep.subr.bf16.mxu0 %v710
    %838 = vmatpush1.bf16.msra.mxu0 %v709
    %839 = vmatprep.subr.bf16.mxu0 %v712
    %840 = vmatpush1.bf16.msra.mxu0 %v711
    %841 = vmatprep.subr.bf16.mxu0 %v714
    %842 = vmatpush1.bf16.msra.mxu0 %v713
    %843 = vmatprep.subr.bf16.mxu0 %v716
    %844 = vmatpush1.bf16.msra.mxu0 %v715
    %845 = vmatprep.subr.bf16.mxu0 %v718
    %846 = vmatpush1.bf16.msra.mxu0 %v717
    %847 = vmatprep.subr.bf16.mxu0 %v720
    %848 = vmatpush1.bf16.msra.mxu0 %v719
    %849 = vmatprep.subr.bf16.mxu0 %v722
    %850 = vmatpush1.bf16.msra.mxu0 %v721
    %851 = vmatprep.subr.bf16.mxu0 %v724
    %852 = vmatpush1.bf16.msra.mxu0 %v723
    %853 = vmatprep.subr.bf16.mxu0 %v726
    %854 = vmatpush1.bf16.msra.mxu0 %v725
    %855 = vmatprep.subr.bf16.mxu0 %v728
    %856 = vmatpush1.bf16.msra.mxu0 %v727
    %857 = vmatprep.subr.bf16.mxu0 %v730
    %858 = vmatpush1.bf16.msra.mxu0 %v729
    %859 = vmatprep.mubr.bf16.mxu0 %v440
    %860 = vmatmul.mubr.bf16.gmra.mrb[0].mxu0 %v439
    %v861 = vpop.f32.mrb[0].mxu0
    %v862 = vadd.f32 0.0, %v861
    %v863 = vpop.f32.mrb[0].mxu0
    %v864 = vadd.f32 0.0, %v863
    %v865 = vpop.f32.mrb[0].mxu0
    %v866 = vpop.f32.mrb[0].mxu0
    %867 = vdwg.mxu0
    %868 = vmatprep.subr.bf16.mxu0 %v732
    %869 = vmatpush1.bf16.msra.mxu0 %v731
    %870 = vmatprep.subr.bf16.mxu0 %v734
    %871 = vmatpush1.bf16.msra.mxu0 %v733
    %872 = vmatprep.subr.bf16.mxu0 %v736
    %873 = vmatpush1.bf16.msra.mxu0 %v735
    %874 = vmatprep.subr.bf16.mxu0 %v738
    %875 = vmatpush1.bf16.msra.mxu0 %v737
    %876 = vmatprep.subr.bf16.mxu0 %v740
    %877 = vmatpush1.bf16.msra.mxu0 %v739
    %878 = vmatprep.subr.bf16.mxu0 %v742
    %879 = vmatpush1.bf16.msra.mxu0 %v741
    %880 = vmatprep.subr.bf16.mxu0 %v744
    %881 = vmatpush1.bf16.msra.mxu0 %v743
    %882 = vmatprep.subr.bf16.mxu0 %v746
    %883 = vmatpush1.bf16.msra.mxu0 %v745
    %884 = vmatprep.subr.bf16.mxu0 %v748
    %885 = vmatpush1.bf16.msra.mxu0 %v747
    %886 = vmatprep.subr.bf16.mxu0 %v750
    %887 = vmatpush1.bf16.msra.mxu0 %v749
    %888 = vmatprep.subr.bf16.mxu0 %v752
    %889 = vmatpush1.bf16.msra.mxu0 %v751
    %890 = vmatprep.subr.bf16.mxu0 %v754
    %891 = vmatpush1.bf16.msra.mxu0 %v753
    %892 = vmatprep.subr.bf16.mxu0 %v756
    %893 = vmatpush1.bf16.msra.mxu0 %v755
    %894 = vmatprep.subr.bf16.mxu0 %v758
    %895 = vmatpush1.bf16.msra.mxu0 %v757
    %896 = vmatprep.subr.bf16.mxu0 %v760
    %897 = vmatpush1.bf16.msra.mxu0 %v759
    %898 = vmatprep.subr.bf16.mxu0 %v762
    %899 = vmatpush1.bf16.msra.mxu0 %v761
    %900 = vmatprep.mubr.bf16.mxu0 %v442
    %901 = vmatmul.mubr.bf16.gmra.mrb[0].mxu0 %v441
    %v902 = vpop.f32.mrb[0].mxu0
    %v903 = vadd.f32 %v862, %v902
    %v904 = vpop.f32.mrb[0].mxu0
    %v905 = vadd.f32 %v864, %v904
    %v906 = vpop.f32.mrb[0].mxu0
    %v907 = vpop.f32.mrb[0].mxu0
    %908 = vdwg.mxu0
    %v909 = vpack.c.bf16 %v903, %v903
    %v910 = vpack.c.bf16 %v905, %v905
    %v911 = vld [vmem:[%s4] sm:$0x3]
    %v913 = vlaneseq
    %v914 = vshrl.u32 %v913, 7
    %v915 = vsub.s32 0, %v914
    %v916 = vrot.slane %v911, %v915
    %v917 = vlaneseq
    %v918 = vshrl.u32 %v917, 7
    %v919 = vsub.s32 1, %v918
    %v920 = vrot.slane %v911, %v919
    %v923 = vpack.c.bf16 %v916, %v916
    %v924 = vpack.c.bf16 %v920, %v920
    %v926 = vpack.i.b16 %v923, %v923
    %v928 = vlaneseq
    %v929 = vshrl.u32 %v928, 7
    %v930 = vsub.s32 0, %v929
    %v931 = vrot.slane %v926, %v930
    %v933 = vpack.i.b16 %v924, %v924
    %v935 = vlaneseq
    %v936 = vshrl.u32 %v935, 7
    %v937 = vsub.s32 0, %v936
    %v938 = vrot.slane %v933, %v937
    %v939 = vadd.bf16 %v909, %v931
    %v940 = vadd.bf16 %v910, %v938
    %v941 = vmax.bf16 %v939, 0
    %v942 = vmax.bf16 %v940, 0
    %v943 = vld [vmem:[#allocation10] sm:$0xf]
    %v944 = vld [vmem:[#allocation10 + $0x4] sm:$0xf]
    %v945 = vld [vmem:[#allocation10 + $0x8] sm:$0xf]
    %v946 = vld [vmem:[#allocation10 + $0xc] sm:$0xf]
    %v947 = vld [vmem:[#allocation10 + $0x10] sm:$0xf]
    %v948 = vld [vmem:[#allocation10 + $0x14] sm:$0xf]
    %v949 = vld [vmem:[#allocation10 + $0x18] sm:$0xf]
    %v950 = vld [vmem:[#allocation10 + $0x1c] sm:$0xf]
    %v951 = vld [vmem:[#allocation10 + $0x20] sm:$0xf]
    %v952 = vld [vmem:[#allocation10 + $0x24] sm:$0xf]
    %v953 = vld [vmem:[#allocation10 + $0x28] sm:$0xf]
    %v954 = vld [vmem:[#allocation10 + $0x2c] sm:$0xf]
    %v955 = vld [vmem:[#allocation10 + $0x30] sm:$0xf]
    %v956 = vld [vmem:[#allocation10 + $0x34] sm:$0xf]
    %v957 = vld [vmem:[#allocation10 + $0x38] sm:$0xf]
    %v958 = vld [vmem:[#allocation10 + $0x3c] sm:$0xf]
    %v959 = vld [vmem:[#allocation10 + $0x40] sm:$0xf]
    %v960 = vld [vmem:[#allocation10 + $0x44] sm:$0xf]
    %v961 = vld [vmem:[#allocation10 + $0x48] sm:$0xf]
    %v962 = vld [vmem:[#allocation10 + $0x4c] sm:$0xf]
    %v963 = vld [vmem:[#allocation10 + $0x50] sm:$0xf]
    %v964 = vld [vmem:[#allocation10 + $0x54] sm:$0xf]
    %v965 = vld [vmem:[#allocation10 + $0x58] sm:$0xf]
    %v966 = vld [vmem:[#allocation10 + $0x5c] sm:$0xf]
    %v967 = vld [vmem:[#allocation10 + $0x60] sm:$0xf]
    %v968 = vld [vmem:[#allocation10 + $0x64] sm:$0xf]
    %v969 = vld [vmem:[#allocation10 + $0x68] sm:$0xf]
    %v970 = vld [vmem:[#allocation10 + $0x6c] sm:$0xf]
    %v971 = vld [vmem:[#allocation10 + $0x70] sm:$0xf]
    %v972 = vld [vmem:[#allocation10 + $0x74] sm:$0xf]
    %v973 = vld [vmem:[#allocation10 + $0x78] sm:$0xf]
    %v974 = vld [vmem:[#allocation10 + $0x7c] sm:$0xf]
    %v975 = vld [vmem:[%s6] sm:$0x1]
    %v977 = vlaneseq
    %v978 = vshrl.u32 %v977, 7
    %v979 = vsub.s32 0, %v978
    %v980 = vrot.slane %v975, %v979
    %v1014 = vunpack.c.l.b16 %v943
    %v1015 = vunpack.c.l.b16 %v944
    %v1016 = vunpack.c.l.b16 %v945
    %v1017 = vunpack.c.l.b16 %v946
    %v1018 = vunpack.c.l.b16 %v947
    %v1019 = vunpack.c.l.b16 %v948
    %v1020 = vunpack.c.l.b16 %v949
    %v1021 = vunpack.c.l.b16 %v950
    %v1022 = vunpack.c.l.b16 %v951
    %v1023 = vunpack.c.l.b16 %v952
    %v1024 = vunpack.c.l.b16 %v953
    %v1025 = vunpack.c.l.b16 %v954
    %v1026 = vunpack.c.l.b16 %v955
    %v1027 = vunpack.c.l.b16 %v956
    %v1028 = vunpack.c.l.b16 %v957
    %v1029 = vunpack.c.l.b16 %v958
    %v1030 = vunpack.c.l.b16 %v959
    %v1031 = vunpack.c.l.b16 %v960
    %v1032 = vunpack.c.l.b16 %v961
    %v1033 = vunpack.c.l.b16 %v962
    %v1034 = vunpack.c.l.b16 %v963
    %v1035 = vunpack.c.l.b16 %v964
    %v1036 = vunpack.c.l.b16 %v965
    %v1037 = vunpack.c.l.b16 %v966
    %v1038 = vunpack.c.l.b16 %v967
    %v1039 = vunpack.c.l.b16 %v968
    %v1040 = vunpack.c.l.b16 %v969
    %v1041 = vunpack.c.l.b16 %v970
    %v1042 = vunpack.c.l.b16 %v971
    %v1043 = vunpack.c.l.b16 %v972
    %v1044 = vunpack.c.l.b16 %v973
    %v1045 = vunpack.c.l.b16 %v974
    %v1046 = vpack.c.b16 %v1015, %v1014
    %v1047 = vpack.c.b16 %v1017, %v1016
    %v1048 = vpack.c.b16 %v1019, %v1018
    %v1049 = vpack.c.b16 %v1021, %v1020
    %v1050 = vpack.c.b16 %v1023, %v1022
    %v1051 = vpack.c.b16 %v1025, %v1024
    %v1052 = vpack.c.b16 %v1027, %v1026
    %v1053 = vpack.c.b16 %v1029, %v1028
    %v1054 = vpack.c.b16 %v1031, %v1030
    %v1055 = vpack.c.b16 %v1033, %v1032
    %v1056 = vpack.c.b16 %v1035, %v1034
    %v1057 = vpack.c.b16 %v1037, %v1036
    %v1058 = vpack.c.b16 %v1039, %v1038
    %v1059 = vpack.c.b16 %v1041, %v1040
    %v1060 = vpack.c.b16 %v1043, %v1042
    %v1061 = vpack.c.b16 %v1045, %v1044
    %1078 = vmatprep.subr.bf16.mxu0 0
    %1079 = vmatpush1.bf16.msra.mxu0 %v1046
    %1080 = vmatprep.subr.bf16.mxu0 0
    %1081 = vmatpush1.bf16.msra.mxu0 %v1047
    %1082 = vmatprep.subr.bf16.mxu0 0
    %1083 = vmatpush1.bf16.msra.mxu0 %v1048
    %1084 = vmatprep.subr.bf16.mxu0 0
    %1085 = vmatpush1.bf16.msra.mxu0 %v1049
    %1086 = vmatprep.subr.bf16.mxu0 0
    %1087 = vmatpush1.bf16.msra.mxu0 %v1050
    %1088 = vmatprep.subr.bf16.mxu0 0
    %1089 = vmatpush1.bf16.msra.mxu0 %v1051
    %1090 = vmatprep.subr.bf16.mxu0 0
    %1091 = vmatpush1.bf16.msra.mxu0 %v1052
    %1092 = vmatprep.subr.bf16.mxu0 0
    %1093 = vmatpush1.bf16.msra.mxu0 %v1053
    %1094 = vmatprep.subr.bf16.mxu0 0
    %1095 = vmatpush1.bf16.msra.mxu0 %v1054
    %1096 = vmatprep.subr.bf16.mxu0 0
    %1097 = vmatpush1.bf16.msra.mxu0 %v1055
    %1098 = vmatprep.subr.bf16.mxu0 0
    %1099 = vmatpush1.bf16.msra.mxu0 %v1056
    %1100 = vmatprep.subr.bf16.mxu0 0
    %1101 = vmatpush1.bf16.msra.mxu0 %v1057
    %1102 = vmatprep.subr.bf16.mxu0 0
    %1103 = vmatpush1.bf16.msra.mxu0 %v1058
    %1104 = vmatprep.subr.bf16.mxu0 0
    %1105 = vmatpush1.bf16.msra.mxu0 %v1059
    %1106 = vmatprep.subr.bf16.mxu0 0
    %1107 = vmatpush1.bf16.msra.mxu0 %v1060
    %1108 = vmatprep.subr.bf16.mxu0 0
    %1109 = vmatpush1.bf16.msra.mxu0 %v1061
    %1110 = vmatprep.mubr.bf16.mxu0 %v942
    %1111 = vmatmul.mubr.bf16.gmra.mrb[0].mxu0 %v941
    %v1112 = vpop.f32.mrb[0].mxu0
    %v1113 = vadd.f32 %v980, %v1112
    %v1114 = vpop.f32.mrb[0].mxu0
    %v1115 = vpop.f32.mrb[0].mxu0
    %v1116 = vpop.f32.mrb[0].mxu0
    %1117 = vdwg.mxu0
    %v1118 = vpack.c.bf16 %v1113, %v1113
    %1119 = vst [vmem:[#allocation11] sm:$0xf] %v1118
    // Predicated region
    $region50: #{tpu_custom_call.1} parent=1 // pred_check
      _
    $region51: #{tpu_custom_call.1} parent=1 // pred_check_branch
      %1121 = sbr.rel (0) target = $region53
    $region52: #{tpu_custom_call.1} parent=1 // pred_region
      %s1123 = ssub.s32 64, 64
      %1124 = vsyncadd [#allocation4], %s1123
      %s1126 = sshll.u32 [#allocation11], 4
      %s1127 = int_to_ptr.vmem [resolvable:$true] %s1126
      %1129 = dma.vmem_to_hbm [thread:$0]  %s1127, 64, %s7, [#allocation4]
    $region53: #{tpu_custom_call.1} parent=1 // pred_fallthru
      _
    // Predicated region
    $region54: #{tpu_custom_call.1} parent=1 // pred_check
      _
    $region55: #{tpu_custom_call.1} parent=1 // pred_check_branch
      %1131 = sbr.rel (0) target = $region57
    $region56: #{tpu_custom_call.1} parent=1 // pred_region
      %1132 = dma.done [#allocation4], 64
    $region57: #{tpu_custom_call.1} parent=1 // pred_fallthru
      _
    %1133 = vsyncpa [#allocation3], 1
    %1134 = vsyncpa [#allocation6], 1
    %1135 = vsyncpa [#allocation9], 1
    %1136 = vsyncpa [#allocation4], 1

</llo_original>
